<compile_context>
chip_gen: v7x
topology: tpu7x:2x2x1
jax: 0.10.0
libtpu: 0.0.40
codegen_flags: <defaults>
</compile_context>

<pallas_src>
import math

import jax
import jax.numpy as jnp
from jax.experimental import pallas as pl
from jax.experimental.pallas import tpu as pltpu

_LANES = 128


def resnet_wsl_forward(x_nchw, params, *, alpha=1.0, tile_ho=4):
    """Fused ResNetWSL forward (dense=False). Returns (B, num_classes*num_maps)."""
    B, Cin, H, W = x_nchw.shape
    F = params["wf"].shape[0]
    C = params["wc"].shape[0]
    assert H % 2 == 0 and W % 2 == 0
    Ho, Wo = H // 2, W // 2

    # Pad feature / class-map channels to full 128-lane width (zero pad => exact math).
    Fp = _LANES * pl.cdiv(F, _LANES)
    Cp = _LANES * pl.cdiv(C, _LANES)

    # Spatial tiling over pooled output rows; wildcat max/min accumulated across tiles.
    th_o = max(1, min(tile_ho, Ho))
    while Ho % th_o:
        th_o -= 1
    th_i = 2 * th_o           # input rows per tile
    n_t = Ho // th_o
    # keeps every in-kernel reshape sublane-aligned (layout-free) at these shapes
    assert (th_i * W) % 8 == 0 and Wo % 8 == 0

    # NCHW -> NHWC: channels map to lanes, 1x1 convs become channel matmuls / FMAs.
    x = jnp.transpose(x_nchw, (0, 2, 3, 1))

    # Fold BatchNorm (affine) into the features 1x1 conv: w*scale, b*scale + shift.
    wf_fold = params["wf"] * params["bn_scale"].T                      # (F, Cin)
    bf_fold = params["bf"] * params["bn_scale"] + params["bn_shift"]   # (1, F)
    wf_t = jnp.zeros((Cin, Fp), jnp.float32).at[:, :F].set(wf_fold.T)  # (Cin, Fp)
    bf_p = jnp.zeros((1, Fp), jnp.float32).at[:, :F].set(bf_fold)
    # Classifier weights as bf16 MXU operand (f32 accumulate); bias stays f32.
    wc_t = jnp.zeros((Fp, Cp), jnp.float32).at[:F, :C].set(params["wc"].T)
    wc_t = wc_t.astype(jnp.bfloat16)
    bc_p = jnp.zeros((1, Cp), jnp.float32).at[:, :C].set(params["bc"])

    def kernel(x_ref, wf_ref, bf_ref, wc_ref, bc_ref, o_ref,
               h_s, hw_s, mx_s, mn_s):
        t = pl.program_id(1)

        @pl.when(t == 0)
        def _init():
            mx_s[...] = jnp.full_like(mx_s, -jnp.inf)
            mn_s[...] = jnp.full_like(mn_s, jnp.inf)

        # ---- features stand-in: 1x1 conv (BN pre-folded) as Cin broadcast FMAs (VPU) ----
        # Cin=3 is far too shallow a contraction to be worth the MXU systolic pipeline.
        xt = x_ref[...].reshape(th_i * W, Cin)            # (rows, Cin)
        wf = wf_ref[...]                                  # (Cin, Fp)
        h = xt[:, 0:1] * wf[0:1, :]
        for c in range(1, Cin):                           # static unroll
            h = h + xt[:, c:c + 1] * wf[c:c + 1, :]
        h_s[...] = jnp.maximum(h + bf_ref[...], 0.0)      # bias + ReLU, (th_i*W, Fp)

        # ---- 2x2 / stride-2 maxpool: strided ref loads + elementwise VPU max ----
        hw = jnp.maximum(h_s[pl.ds(0, th_i * Wo, stride=2), :],
                         h_s[pl.ds(1, th_i * Wo, stride=2), :])        # pool along W
        hw_s[...] = hw.reshape(th_i, Wo, Fp)
        hp = jnp.maximum(hw_s[pl.ds(0, th_o, stride=2), :, :],
                         hw_s[pl.ds(1, th_o, stride=2), :, :])         # pool along H
        feat = hp.reshape(th_o * Wo, Fp)                               # (spatial, Fp)

        # ---- classifier 1x1 conv: bf16 x bf16 -> f32 on the MXU (lane-dense K=N=128) ----
        s = jnp.dot(feat.astype(jnp.bfloat16), wc_ref[...],
                    preferred_element_type=jnp.float32) + bc_ref[...]  # (spatial, Cp)

        # ---- WildcatPool2d(kmax=1, kmin=1): running spatial max / min accumulators ----
        mx_s[...] = jnp.maximum(mx_s[...], jnp.max(s, axis=0, keepdims=True))
        mn_s[...] = jnp.minimum(mn_s[...], jnp.min(s, axis=0, keepdims=True))

        @pl.when(t == pl.num_programs(1) - 1)
        def _finalize():
            # original wildcat divides by 2 when kmin > 0 and alpha != 0
            pooled = 0.5 * (mx_s[...] + alpha * mn_s[...])
            o_ref[...] = pooled.reshape(1, 1, Cp)          # lane-dense (1,1,128) store

    out_p = pl.pallas_call(
        kernel,
        out_shape=jax.ShapeDtypeStruct((B, 1, Cp), jnp.float32),
        grid_spec=pltpu.PrefetchScalarGridSpec(
            num_scalar_prefetch=0,
            grid=(B, n_t),
            in_specs=[
                pl.BlockSpec((1, th_i, W, Cin), lambda b, t: (b, t, 0, 0)),
                pl.BlockSpec((Cin, Fp), lambda b, t: (0, 0)),
                pl.BlockSpec((1, Fp), lambda b, t: (0, 0)),
                pl.BlockSpec((Fp, Cp), lambda b, t: (0, 0)),
                pl.BlockSpec((1, Cp), lambda b, t: (0, 0)),
            ],
            out_specs=pl.BlockSpec((1, 1, Cp), lambda b, t: (b, 0, 0)),
            scratch_shapes=[
                pltpu.VMEM((th_i * W, Fp), jnp.float32),   # conv+ReLU output
                pltpu.VMEM((th_i, Wo, Fp), jnp.float32),   # W-pooled rows
                pltpu.VMEM((1, Cp), jnp.float32),          # running spatial max
                pltpu.VMEM((1, Cp), jnp.float32),          # running spatial min
            ],
        ),
        compiler_params=pltpu.CompilerParams(
            dimension_semantics=("parallel", "arbitrary")),  # batch across 2 TCs on v7x
    )(x, wf_t, bf_p, wc_t, bc_p)

    return out_p[:, 0, :C]   # (B, num_classes * num_maps)


if __name__ == "__main__":
    key = jax.random.PRNGKey(0)
    B, Cin, H, W = 2, 3, 16, 16
    num_features, num_classes, num_maps = 32, 4, 2
    C = num_classes * num_maps
    keys = jax.random.split(key, 9)

    x = jax.random.normal(keys[0], (B, Cin, H, W), jnp.float32)

    # --- synthetic features stand-in parameters (deterministic) ---
    wf = jax.random.normal(keys[1], (num_features, Cin), jnp.float32) * 0.1
    bf = jax.random.normal(keys[2], (1, num_features), jnp.float32) * 0.1
    gamma = jax.random.uniform(keys[3], (1, num_features), minval=0.5, maxval=1.5)
    beta = jax.random.normal(keys[4], (1, num_features), jnp.float32) * 0.1
    mean = jax.random.normal(keys[5], (1, num_features), jnp.float32) * 0.1
    var = jax.random.uniform(keys[6], (1, num_features), minval=0.5, maxval=1.5)
    eps = 1e-5
    bn_scale = gamma / jnp.sqrt(var + eps)
    bn_shift = beta - mean * bn_scale

    # --- classifier init: matches PyTorch init_weights for Conv2d(kernel_size=1) ---
    n = num_features * 1 * 1
    stdv = (1.0 / math.sqrt(n)) / (2.0 * math.sqrt(2.0))
    wc = jax.random.uniform(keys[7], (C, num_features), jnp.float32, -stdv, stdv)
    bc = jax.random.uniform(keys[8], (1, C), jnp.float32, -stdv, stdv)

    params = dict(wf=wf, bf=bf, bn_scale=bn_scale, bn_shift=bn_shift, wc=wc, bc=bc)

    out = jax.block_until_ready(resnet_wsl_forward(x, params))
    assert out.shape == (B, C)

    # --- pure-JAX reference (unfolded BN; same bf16 classifier contraction) ---
    x_flat = jnp.transpose(x, (0, 2, 3, 1)).reshape(B * H * W, Cin)
    hr = jnp.maximum((x_flat @ wf.T + bf) * bn_scale + bn_shift, 0.0)
    hr = hr.reshape(B, H // 2, 2, W // 2, 2, num_features).max(axis=(2, 4))
    fr = hr.reshape(B * (H // 2) * (W // 2), num_features)
    sr = jnp.dot(fr.astype(jnp.bfloat16), wc.T.astype(jnp.bfloat16),
                 preferred_element_type=jnp.float32) + bc
    sr = sr.reshape(B, -1, C)
    ref = 0.5 * (sr.max(axis=1) + sr.min(axis=1))
    assert jnp.allclose(out, ref, atol=5e-3, rtol=5e-3), \
        float(jnp.max(jnp.abs(out - ref)))

    print("KERNEL_OK")
</pallas_src>

<mosaic_0001>
module attributes {stable_mosaic.version = 11 : i64} {
  func.func @kernel(%arg0: i32, %arg1: i32, %arg2: memref<1x8x16x3xf32, #tpu.memory_space<vmem>>, %arg3: memref<3x128xf32, #tpu.memory_space<vmem>>, %arg4: memref<1x128xf32, #tpu.memory_space<vmem>>, %arg5: memref<128x128xbf16, #tpu.memory_space<vmem>>, %arg6: memref<1x128xf32, #tpu.memory_space<vmem>>, %arg7: memref<1x1x128xf32, #tpu.memory_space<vmem>>, %arg8: memref<128x128xf32, #tpu.memory_space<vmem>>, %arg9: memref<8x8x128xf32, #tpu.memory_space<vmem>>, %arg10: memref<1x128xf32, #tpu.memory_space<vmem>>, %arg11: memref<1x128xf32, #tpu.memory_space<vmem>>) attributes {dimension_semantics = [#tpu.dimension_semantics<parallel>, #tpu.dimension_semantics<arbitrary>], iteration_bounds = array<i64: 2, 2>, scalar_prefetch = 0 : i64, scratch_operands = 4 : i64, tpu.core_type = #tpu.core_type<tc>, window_params = [{transform_indices = @transform_0, window_bounds = array<i64: 1, 8, 16, 3>}, {pipeline_mode = #tpu.pipeline_mode<synchronous>, transform_indices = @transform_1, window_bounds = array<i64: 3, 128>}, {pipeline_mode = #tpu.pipeline_mode<synchronous>, transform_indices = @transform_2, window_bounds = array<i64: 1, 128>}, {pipeline_mode = #tpu.pipeline_mode<synchronous>, transform_indices = @transform_3, window_bounds = array<i64: 128, 128>}, {pipeline_mode = #tpu.pipeline_mode<synchronous>, transform_indices = @transform_4, window_bounds = array<i64: 1, 128>}, {transform_indices = @transform_5, window_bounds = array<i64: 1, 1, 128>}]} {
    %c0_i32 = arith.constant 0 : i32
    %0 = arith.cmpi eq, %arg1, %c0_i32 : i32
    %1 = arith.extui %0 : i1 to i32
    %c0_i32_0 = arith.constant 0 : i32
    %2 = arith.cmpi ne, %1, %c0_i32_0 : i32
    scf.if %2 {
      %cst_38 = arith.constant 0xFF800000 : f32
      %57 = vector.broadcast %cst_38 : f32 to vector<1x128xf32>
      %c0_39 = arith.constant 0 : index
      %c0_40 = arith.constant 0 : index
      %58 = vector.load %arg10[%c0_39, %c0_40] : memref<1x128xf32, #tpu.memory_space<vmem>>, vector<1x128xf32>
      tpu.vector_store %arg10[%c0_39, %c0_40], %57 {strides = array<i32>} : memref<1x128xf32, #tpu.memory_space<vmem>>, vector<1x128xf32>,
      %cst_41 = arith.constant 0x7F800000 : f32
      %59 = vector.broadcast %cst_41 : f32 to vector<1x128xf32>
      %c0_42 = arith.constant 0 : index
      %c0_43 = arith.constant 0 : index
      %60 = vector.load %arg11[%c0_42, %c0_43] : memref<1x128xf32, #tpu.memory_space<vmem>>, vector<1x128xf32>
      tpu.vector_store %arg11[%c0_42, %c0_43], %59 {strides = array<i32>} : memref<1x128xf32, #tpu.memory_space<vmem>>, vector<1x128xf32>,
    } else {
    }
    %c0 = arith.constant 0 : index
    %c0_1 = arith.constant 0 : index
    %c0_2 = arith.constant 0 : index
    %c0_3 = arith.constant 0 : index
    %3 = vector.load %arg2[%c0, %c0_1, %c0_2, %c0_3] : memref<1x8x16x3xf32, #tpu.memory_space<vmem>>, vector<1x8x16x3xf32>
    %4 = vector.shape_cast %3 : vector<1x8x16x3xf32> to vector<128x3xf32>
    %c0_4 = arith.constant 0 : index
    %c0_5 = arith.constant 0 : index
    %5 = vector.load %arg3[%c0_4, %c0_5] : memref<3x128xf32, #tpu.memory_space<vmem>>, vector<3x128xf32>
    %6 = vector.extract_strided_slice %4 {offsets = [0, 0], sizes = [128, 1], strides = [1, 1]} : vector<128x3xf32> to vector<128x1xf32>
    %7 = vector.extract_strided_slice %5 {offsets = [0, 0], sizes = [1, 128], strides = [1, 1]} : vector<3x128xf32> to vector<1x128xf32>
    %8 = vector.broadcast %6 : vector<128x1xf32> to vector<128x128xf32>
    %9 = vector.broadcast %7 : vector<1x128xf32> to vector<128x128xf32>
    %10 = arith.mulf %8, %9 : vector<128x128xf32>
    %11 = vector.extract_strided_slice %4 {offsets = [0, 1], sizes = [128, 1], strides = [1, 1]} : vector<128x3xf32> to vector<128x1xf32>
    %12 = vector.extract_strided_slice %5 {offsets = [1, 0], sizes = [1, 128], strides = [1, 1]} : vector<3x128xf32> to vector<1x128xf32>
    %13 = vector.broadcast %11 : vector<128x1xf32> to vector<128x128xf32>
    %14 = vector.broadcast %12 : vector<1x128xf32> to vector<128x128xf32>
    %15 = arith.mulf %13, %14 : vector<128x128xf32>
    %16 = arith.addf %10, %15 : vector<128x128xf32>
    %17 = vector.extract_strided_slice %4 {offsets = [0, 2], sizes = [128, 1], strides = [1, 1]} : vector<128x3xf32> to vector<128x1xf32>
    %18 = vector.extract_strided_slice %5 {offsets = [2, 0], sizes = [1, 128], strides = [1, 1]} : vector<3x128xf32> to vector<1x128xf32>
    %19 = vector.broadcast %17 : vector<128x1xf32> to vector<128x128xf32>
    %20 = vector.broadcast %18 : vector<1x128xf32> to vector<128x128xf32>
    %21 = arith.mulf %19, %20 : vector<128x128xf32>
    %22 = arith.addf %16, %21 : vector<128x128xf32>
    %c0_6 = arith.constant 0 : index
    %c0_7 = arith.constant 0 : index
    %23 = vector.load %arg4[%c0_6, %c0_7] : memref<1x128xf32, #tpu.memory_space<vmem>>, vector<1x128xf32>
    %24 = vector.broadcast %23 : vector<1x128xf32> to vector<128x128xf32>
    %25 = arith.addf %22, %24 : vector<128x128xf32>
    %cst = arith.constant 0.000000e+00 : f32
    %26 = vector.broadcast %cst : f32 to vector<128x128xf32>
    %27 = arith.maximumf %25, %26 : vector<128x128xf32>
    %c0_8 = arith.constant 0 : index
    %c0_9 = arith.constant 0 : index
    %28 = vector.load %arg8[%c0_8, %c0_9] : memref<128x128xf32, #tpu.memory_space<vmem>>, vector<128x128xf32>
    tpu.vector_store %arg8[%c0_8, %c0_9], %27 {strides = array<i32>} : memref<128x128xf32, #tpu.memory_space<vmem>>, vector<128x128xf32>,
    %c0_10 = arith.constant 0 : index
    %c0_11 = arith.constant 0 : index
    %29 = tpu.strided_load %arg8[%c0_10, %c0_11] {strides = array<i32: 2, 1>} : memref<128x128xf32, #tpu.memory_space<vmem>>, vector<64x128xf32>
    %c1 = arith.constant 1 : index
    %c0_12 = arith.constant 0 : index
    %30 = tpu.strided_load %arg8[%c1, %c0_12] {strides = array<i32: 2, 1>} : memref<128x128xf32, #tpu.memory_space<vmem>>, vector<64x128xf32>
    %31 = arith.maximumf %29, %30 : vector<64x128xf32>
    %32 = vector.shape_cast %31 : vector<64x128xf32> to vector<8x8x128xf32>
    %c0_13 = arith.constant 0 : index
    %c0_14 = arith.constant 0 : index
    %c0_15 = arith.constant 0 : index
    %33 = vector.load %arg9[%c0_13, %c0_14, %c0_15] : memref<8x8x128xf32, #tpu.memory_space<vmem>>, vector<8x8x128xf32>
    tpu.vector_store %arg9[%c0_13, %c0_14, %c0_15], %32 {strides = array<i32>} : memref<8x8x128xf32, #tpu.memory_space<vmem>>, vector<8x8x128xf32>,
    %c0_16 = arith.constant 0 : index
    %c0_17 = arith.constant 0 : index
    %c0_18 = arith.constant 0 : index
    %34 = tpu.strided_load %arg9[%c0_16, %c0_17, %c0_18] {strides = array<i32: 2, 1, 1>} : memref<8x8x128xf32, #tpu.memory_space<vmem>>, vector<4x8x128xf32>
    %c1_19 = arith.constant 1 : index
    %c0_20 = arith.constant 0 : index
    %c0_21 = arith.constant 0 : index
    %35 = tpu.strided_load %arg9[%c1_19, %c0_20, %c0_21] {strides = array<i32: 2, 1, 1>} : memref<8x8x128xf32, #tpu.memory_space<vmem>>, vector<4x8x128xf32>
    %36 = arith.maximumf %34, %35 : vector<4x8x128xf32>
    %37 = vector.shape_cast %36 : vector<4x8x128xf32> to vector<32x128xf32>
    %38 = arith.truncf %37 : vector<32x128xf32> to vector<32x128xbf16>
    %c0_22 = arith.constant 0 : index
    %c0_23 = arith.constant 0 : index
    %39 = vector.load %arg5[%c0_22, %c0_23] : memref<128x128xbf16, #tpu.memory_space<vmem>>, vector<128x128xbf16>
    %cst_24 = arith.constant dense<0.000000e+00> : vector<32x128xf32>
    %40 = tpu.matmul %38, %39, %cst_24 {dimension_numbers = #tpu.dot_dimension_numbers<[1], [0], [0], [1], [0, 0, 1, 1], [], []>} : vector<32x128xbf16>, vector<128x128xbf16>, vector<32x128xf32> -> vector<32x128xf32>
    %c0_25 = arith.constant 0 : index
    %c0_26 = arith.constant 0 : index
    %41 = vector.load %arg6[%c0_25, %c0_26] : memref<1x128xf32, #tpu.memory_space<vmem>>, vector<1x128xf32>
    %42 = vector.broadcast %41 : vector<1x128xf32> to vector<32x128xf32>
    %43 = arith.addf %40, %42 : vector<32x128xf32>
    %c0_27 = arith.constant 0 : index
    %c0_28 = arith.constant 0 : index
    %44 = vector.load %arg10[%c0_27, %c0_28] : memref<1x128xf32, #tpu.memory_space<vmem>>, vector<1x128xf32>
    %cst_29 = arith.constant dense<0xFF800000> : vector<128xf32>
    %45 = vector.multi_reduction <maximumf>, %43, %cst_29 [0] : vector<32x128xf32> to vector<128xf32>
    %46 = vector.shape_cast %45 : vector<128xf32> to vector<1x128xf32>
    %47 = arith.maximumf %44, %46 : vector<1x128xf32>
    %c0_30 = arith.constant 0 : index
    %c0_31 = arith.constant 0 : index
    %48 = vector.load %arg10[%c0_30, %c0_31] : memref<1x128xf32, #tpu.memory_space<vmem>>, vector<1x128xf32>
    tpu.vector_store %arg10[%c0_30, %c0_31], %47 {strides = array<i32>} : memref<1x128xf32, #tpu.memory_space<vmem>>, vector<1x128xf32>,
    %c0_32 = arith.constant 0 : index
    %c0_33 = arith.constant 0 : index
    %49 = vector.load %arg11[%c0_32, %c0_33] : memref<1x128xf32, #tpu.memory_space<vmem>>, vector<1x128xf32>
    %cst_34 = arith.constant dense<0x7F800000> : vector<128xf32>
    %50 = vector.multi_reduction <minimumf>, %43, %cst_34 [0] : vector<32x128xf32> to vector<128xf32>
    %51 = vector.shape_cast %50 : vector<128xf32> to vector<1x128xf32>
    %52 = arith.minimumf %49, %51 : vector<1x128xf32>
    %c0_35 = arith.constant 0 : index
    %c0_36 = arith.constant 0 : index
    %53 = vector.load %arg11[%c0_35, %c0_36] : memref<1x128xf32, #tpu.memory_space<vmem>>, vector<1x128xf32>
    tpu.vector_store %arg11[%c0_35, %c0_36], %52 {strides = array<i32>} : memref<1x128xf32, #tpu.memory_space<vmem>>, vector<1x128xf32>,
    %c1_i32 = arith.constant 1 : i32
    %54 = arith.cmpi eq, %arg1, %c1_i32 : i32
    %55 = arith.extui %54 : i1 to i32
    %c0_i32_37 = arith.constant 0 : i32
    %56 = arith.cmpi ne, %55, %c0_i32_37 : i32
    scf.if %56 {
      %c0_38 = arith.constant 0 : index
      %c0_39 = arith.constant 0 : index
      %57 = vector.load %arg10[%c0_38, %c0_39] : memref<1x128xf32, #tpu.memory_space<vmem>>, vector<1x128xf32>
      %c0_40 = arith.constant 0 : index
      %c0_41 = arith.constant 0 : index
      %58 = vector.load %arg11[%c0_40, %c0_41] : memref<1x128xf32, #tpu.memory_space<vmem>>, vector<1x128xf32>
      %cst_42 = arith.constant 1.000000e+00 : f32
      %59 = vector.broadcast %cst_42 : f32 to vector<1x128xf32>
      %60 = arith.mulf %59, %58 : vector<1x128xf32>
      %61 = arith.addf %57, %60 : vector<1x128xf32>
      %cst_43 = arith.constant 5.000000e-01 : f32
      %62 = vector.broadcast %cst_43 : f32 to vector<1x128xf32>
      %63 = arith.mulf %62, %61 : vector<1x128xf32>
      %64 = vector.shape_cast %63 : vector<1x128xf32> to vector<1x1x128xf32>
      %c0_44 = arith.constant 0 : index
      %c0_45 = arith.constant 0 : index
      %c0_46 = arith.constant 0 : index
      %65 = vector.load %arg7[%c0_44, %c0_45, %c0_46] : memref<1x1x128xf32, #tpu.memory_space<vmem>>, vector<1x1x128xf32>
      tpu.vector_store %arg7[%c0_44, %c0_45, %c0_46], %64 {strides = array<i32>} : memref<1x1x128xf32, #tpu.memory_space<vmem>>, vector<1x1x128xf32>,
    } else {
    }
    return
  }
  func.func @transform_0(%arg0: i32, %arg1: i32) -> (i32, i32, i32, i32) {
    %c0_i32 = arith.constant 0 : i32
    %c0_i32_0 = arith.constant 0 : i32
    %c0_i32_1 = arith.constant 0 : i32
    return %arg0, %arg1, %c0_i32, %c0_i32_0 : i32, i32, i32, i32
  }
  func.func @transform_1(%arg0: i32, %arg1: i32) -> (i32, i32) {
    %c0_i32 = arith.constant 0 : i32
    %c0_i32_0 = arith.constant 0 : i32
    %c0_i32_1 = arith.constant 0 : i32
    return %c0_i32, %c0_i32_0 : i32, i32
  }
  func.func @transform_2(%arg0: i32, %arg1: i32) -> (i32, i32) {
    %c0_i32 = arith.constant 0 : i32
    %c0_i32_0 = arith.constant 0 : i32
    %c0_i32_1 = arith.constant 0 : i32
    return %c0_i32, %c0_i32_0 : i32, i32
  }
  func.func @transform_3(%arg0: i32, %arg1: i32) -> (i32, i32) {
    %c0_i32 = arith.constant 0 : i32
    %c0_i32_0 = arith.constant 0 : i32
    %c0_i32_1 = arith.constant 0 : i32
    return %c0_i32, %c0_i32_0 : i32, i32
  }
  func.func @transform_4(%arg0: i32, %arg1: i32) -> (i32, i32) {
    %c0_i32 = arith.constant 0 : i32
    %c0_i32_0 = arith.constant 0 : i32
    %c0_i32_1 = arith.constant 0 : i32
    return %c0_i32, %c0_i32_0 : i32, i32
  }
  func.func @transform_5(%arg0: i32, %arg1: i32) -> (i32, i32, i32) {
    %c0_i32 = arith.constant 0 : i32
    %c0_i32_0 = arith.constant 0 : i32
    %c0_i32_1 = arith.constant 0 : i32
    return %arg0, %c0_i32, %c0_i32_0 : i32, i32, i32
  }
}

</mosaic_0001>

<llo_original>
// kernel: tpu_custom_call.1
$region0: #{tpu_custom_call.1}
  #allocation0 [shape = 'u32[]', space=smem, size = 0x4, offset = 0x4, fixed_abs, tag = 'smem constant byte address 0x4 - core index']
  #allocation1 [shape = 'u32[144,128]{1,0:T(1,128)}', space=vmem, size = 0x12000, scoped, tag = 'internal scratch']
  #allocation2 [shape = 'f32[128,128]{1,0:T(8,128)}', space=vmem, size = 0x10000, scoped, tag = 'scratch operand']
  #allocation3 [shape = 'f32[8,8,128]{2,1,0:T(8,128)}', space=vmem, size = 0x8000, scoped, tag = 'scratch operand']
  #allocation4 [shape = 'f32[1,128]{1,0:T(1,128)}', space=vmem, size = 0x200, scoped, tag = 'scratch operand']
  #allocation5 [shape = 'f32[1,128]{1,0:T(1,128)}', space=vmem, size = 0x200, scoped, tag = 'scratch operand']
  %s0 = inlined_call_operand.vmem [shape: f32[2,16,16,3], index: 0, kind: input, shape index: {}]
  %s1 = inlined_call_operand.vmem [shape: f32[3,128], index: 1, kind: input, shape index: {}]
  %s2 = inlined_call_operand.vmem [shape: f32[1,128], index: 2, kind: input, shape index: {}]
  %s3 = inlined_call_operand.vmem [shape: bf16[128,128], index: 3, kind: input, shape index: {}]
  %s4 = inlined_call_operand.vmem [shape: f32[1,128], index: 4, kind: input, shape index: {}]
  %s5 = inlined_call_operand.hbm [shape: f32[2,1,128], index: 5, kind: output, shape index: {}]
  %s6 = sld [smem:[#allocation0]]
  $region61: #{tpu_custom_call.1} parent=0
    _
  %s8 = ssub.s32 1, %s6
  %s9 = scalar_select 0, %s8, %s6
  $region1: #{tpu_custom_call.1} parent=0
    #allocation6 [shape = 'u8[1024]{0}', space=vmem, size = 0x400, scoped, tag = 'output window, operand 0']
    #allocation7 [shape = 's32[2]{0}', space=sflag, size = 0x8, scoped, tag = 'scoped memory for tpu_custom_call.1']
    %10 = vsyncpa [#allocation7], 0
    %s11 = scalar_lea.sflag [#allocation7], 1
    %12 = vsyncpa %s11, 0
    loop: start=0, step=1, limit=6
    $region2: #{tpu_custom_call.1} parent=1 // loop_pre_header
      _
    $region3: #{tpu_custom_call.1} parent=1 // loop_header
      %s14 = sphi 0, %s18
      %p15 = scmp.ge.s32.totalorder %s14, 6
      %s21 = sphi 0, %s33
      %s22 = sphi 0, %s29
      %s23 = sphi 0, %s21
      %s24 = sphi 0, %s22
      %s25 = sphi 0, %s23
      %s26 = sphi 0, %s24
      %s38 = sphi 0, %s40
      %s41 = sphi 0, %s38
      %s42 = sphi 0, %s41
      %s58 = sphi 0, %s42
      %s62 = sphi 0, %s62
      %s64 = sphi 0, %s62
      %s65 = sphi 0, %s64
      %s79 = sphi 0, %s65
      %s83 = sphi 0, %s83
      %s85 = sphi 0, %s83
      %s86 = sphi 0, %s85
      %s100 = sphi 0, %s86
      %s104 = sphi 0, %s104
      %s106 = sphi 0, %s104
      %s107 = sphi 0, %s106
      %s121 = sphi 0, %s107
      %s125 = sphi 0, %s125
      %s127 = sphi 0, %s125
      %s128 = sphi 0, %s127
      %s142 = sphi 0, %s128
      %s148 = sphi 0, %s150
      %s151 = sphi 0, %s148
      %s152 = sphi 0, %s151
      %s168 = sphi 0, %s152
    $region4: #{tpu_custom_call.1} parent=1 // loop_header_branch
      %17 = sbr.rel (%p15) target = $region8
    $region5: #{tpu_custom_call.1} parent=1 // loop_body
      %s19 = ssub.s32 %s14, 1
      %s20 = ssub.s32 %s14, 2
      %s27 = sadd.s32 1, %s22
      %p28 = scmp.ge.s32.totalorder %s27, 2
      %s29 = scalar_select %p28, 0, %s27
      %s30 = sadd.s32 1, %s21
      %s31 = scalar_select %p28, %s30, %s21
      %p32 = scmp.ge.s32.totalorder %s31, 2
      %s33 = scalar_select %p32, 0, %s31
      %s34 = ssub.s32 %s21, %s33
      %s35 = ssub.s32 %s22, %s29
      %s36 = sor.u32 %s34, %s35
      %p37 = scmp.eq.s32.totalorder %s36, 0
      %s39 = sadd.s32 %s38, 1
      %s40 = scalar_select %p37, %s38, %s39
      %p43 = pneg %p37
      %p44 = scmp.eq.s32.totalorder %s14, 3
      %p45 = por %p43, %p44
      %p46 = scmp.ne.s32.totalorder %s38, %s41
      %p47 = scmp.eq.s32.totalorder %s14, 0
      %p48 = por %p46, %p47
      %p49 = scmp.ne.s32.totalorder %s38, %s41
      %p50 = scmp.eq.s32.totalorder %s19, 3
      %p51 = por %p49, %p50
      %p52 = scmp.ne.s32.totalorder %s41, %s42
      %p53 = scmp.eq.s32.totalorder %s19, 0
      %p54 = por %p52, %p53
      %p55 = scmp.ne.s32.totalorder %s41, %s42
      %p56 = scmp.eq.s32.totalorder %s20, 3
      %p57 = por %p55, %p56
      %p59 = scmp.ne.s32.totalorder %s42, %s58
      %p60 = scmp.eq.s32.totalorder %s20, 0
      %p61 = por %p59, %p60
      %s63 = sadd.s32 %s62, 1
      %p66 = scmp.eq.s32.totalorder %s14, 3
      %p67 = scmp.ne.s32.totalorder %s62, %s64
      %p68 = scmp.eq.s32.totalorder %s14, 0
      %p69 = por %p67, %p68
      %p70 = scmp.ne.s32.totalorder %s62, %s64
      %p71 = scmp.eq.s32.totalorder %s19, 3
      %p72 = por %p70, %p71
      %p73 = scmp.ne.s32.totalorder %s64, %s65
      %p74 = scmp.eq.s32.totalorder %s19, 0
      %p75 = por %p73, %p74
      %p76 = scmp.ne.s32.totalorder %s64, %s65
      %p77 = scmp.eq.s32.totalorder %s20, 3
      %p78 = por %p76, %p77
      %p80 = scmp.ne.s32.totalorder %s65, %s79
      %p81 = scmp.eq.s32.totalorder %s20, 0
      %p82 = por %p80, %p81
      %s84 = sadd.s32 %s83, 1
      %p87 = scmp.eq.s32.totalorder %s14, 3
      %p88 = scmp.ne.s32.totalorder %s83, %s85
      %p89 = scmp.eq.s32.totalorder %s14, 0
      %p90 = por %p88, %p89
      %p91 = scmp.ne.s32.totalorder %s83, %s85
      %p92 = scmp.eq.s32.totalorder %s19, 3
      %p93 = por %p91, %p92
      %p94 = scmp.ne.s32.totalorder %s85, %s86
      %p95 = scmp.eq.s32.totalorder %s19, 0
      %p96 = por %p94, %p95
      %p97 = scmp.ne.s32.totalorder %s85, %s86
      %p98 = scmp.eq.s32.totalorder %s20, 3
      %p99 = por %p97, %p98
      %p101 = scmp.ne.s32.totalorder %s86, %s100
      %p102 = scmp.eq.s32.totalorder %s20, 0
      %p103 = por %p101, %p102
      %s105 = sadd.s32 %s104, 1
      %p108 = scmp.eq.s32.totalorder %s14, 3
      %p109 = scmp.ne.s32.totalorder %s104, %s106
      %p110 = scmp.eq.s32.totalorder %s14, 0
      %p111 = por %p109, %p110
      %p112 = scmp.ne.s32.totalorder %s104, %s106
      %p113 = scmp.eq.s32.totalorder %s19, 3
      %p114 = por %p112, %p113
      %p115 = scmp.ne.s32.totalorder %s106, %s107
      %p116 = scmp.eq.s32.totalorder %s19, 0
      %p117 = por %p115, %p116
      %p118 = scmp.ne.s32.totalorder %s106, %s107
      %p119 = scmp.eq.s32.totalorder %s20, 3
      %p120 = por %p118, %p119
      %p122 = scmp.ne.s32.totalorder %s107, %s121
      %p123 = scmp.eq.s32.totalorder %s20, 0
      %p124 = por %p122, %p123
      %s126 = sadd.s32 %s125, 1
      %p129 = scmp.eq.s32.totalorder %s14, 3
      %p130 = scmp.ne.s32.totalorder %s125, %s127
      %p131 = scmp.eq.s32.totalorder %s14, 0
      %p132 = por %p130, %p131
      %p133 = scmp.ne.s32.totalorder %s125, %s127
      %p134 = scmp.eq.s32.totalorder %s19, 3
      %p135 = por %p133, %p134
      %p136 = scmp.ne.s32.totalorder %s127, %s128
      %p137 = scmp.eq.s32.totalorder %s19, 0
      %p138 = por %p136, %p137
      %p139 = scmp.ne.s32.totalorder %s127, %s128
      %p140 = scmp.eq.s32.totalorder %s20, 3
      %p141 = por %p139, %p140
      %p143 = scmp.ne.s32.totalorder %s128, %s142
      %p144 = scmp.eq.s32.totalorder %s20, 0
      %p145 = por %p143, %p144
      %s146 = ssub.s32 %s21, %s33
      %p147 = scmp.eq.s32.totalorder %s146, 0
      %s149 = sadd.s32 %s148, 1
      %s150 = scalar_select %p147, %s148, %s149
      %p153 = pneg %p147
      %p154 = scmp.eq.s32.totalorder %s14, 3
      %p155 = por %p153, %p154
      %p156 = scmp.ne.s32.totalorder %s148, %s151
      %p157 = scmp.eq.s32.totalorder %s14, 0
      %p158 = por %p156, %p157
      %p159 = scmp.ne.s32.totalorder %s148, %s151
      %p160 = scmp.eq.s32.totalorder %s19, 3
      %p161 = por %p159, %p160
      %p162 = scmp.ne.s32.totalorder %s151, %s152
      %p163 = scmp.eq.s32.totalorder %s19, 0
      %p164 = por %p162, %p163
      %p165 = scmp.ne.s32.totalorder %s151, %s152
      %p166 = scmp.eq.s32.totalorder %s20, 3
      %p167 = por %p165, %p166
      %p169 = scmp.ne.s32.totalorder %s152, %s168
      %p170 = scmp.eq.s32.totalorder %s20, 0
      %p171 = por %p169, %p170
      %p172 = scmp.le.s32.totalorder 1, %s14
      %p173 = scmp.lt.s32.totalorder %s14, 5
      %p174 = pnand %p172, %p173
      %p175 = pneg %p174
      // Predicated region
      $region9: #{tpu_custom_call.1} parent=5 // pred_check
        _
      $region10: #{tpu_custom_call.1} parent=5 // pred_check_branch
        %177 = sbr.rel (%p174) target = $region12
      $region11: #{tpu_custom_call.1} parent=5 // pred_region
        %s178 = ssub.s32 %s14, 1
        // Predicated region
        $region13: #{tpu_custom_call.1} parent=11 // pred_check
          %p179 = pneg %p75
        $region14: #{tpu_custom_call.1} parent=11 // pred_check_branch
          %181 = sbr.rel (%p179) target = $region16
        $region15: #{tpu_custom_call.1} parent=11 // pred_region
          _
        $region16: #{tpu_custom_call.1} parent=11 // pred_fallthru
          _
        // Predicated region
        $region17: #{tpu_custom_call.1} parent=11 // pred_check
          %p182 = pneg %p96
        $region18: #{tpu_custom_call.1} parent=11 // pred_check_branch
          %184 = sbr.rel (%p182) target = $region20
        $region19: #{tpu_custom_call.1} parent=11 // pred_region
          _
        $region20: #{tpu_custom_call.1} parent=11 // pred_fallthru
          _
        // Predicated region
        $region21: #{tpu_custom_call.1} parent=11 // pred_check
          %p185 = pneg %p117
        $region22: #{tpu_custom_call.1} parent=11 // pred_check_branch
          %187 = sbr.rel (%p185) target = $region24
        $region23: #{tpu_custom_call.1} parent=11 // pred_region
          _
        $region24: #{tpu_custom_call.1} parent=11 // pred_fallthru
          _
        // Predicated region
        $region25: #{tpu_custom_call.1} parent=11 // pred_check
          %p188 = pneg %p138
        $region26: #{tpu_custom_call.1} parent=11 // pred_check_branch
          %190 = sbr.rel (%p188) target = $region28
        $region27: #{tpu_custom_call.1} parent=11 // pred_region
          _
        $region28: #{tpu_custom_call.1} parent=11 // pred_fallthru
          _
      $region12: #{tpu_custom_call.1} parent=5 // pred_fallthru
        _
      %p191 = scmp.lt.s32.totalorder %s14, 4
      // Predicated region
      $region29: #{tpu_custom_call.1} parent=5 // pred_check
        %p192 = pneg %p191
      $region30: #{tpu_custom_call.1} parent=5 // pred_check_branch
        %194 = sbr.rel (%p192) target = $region32
      $region31: #{tpu_custom_call.1} parent=5 // pred_region
        // Predicated region
        $region33: #{tpu_custom_call.1} parent=31 // pred_check
          %p195 = pneg %p48
        $region34: #{tpu_custom_call.1} parent=31 // pred_check_branch
          %197 = sbr.rel (%p195) target = $region36
        $region35: #{tpu_custom_call.1} parent=31 // pred_region
          %s198 = smul.u32 8, %s22
          %p199 = scmp.lt.s32.totalorder %s21, 1
          %s200 = scalar_select %p199, %s21, 1
          %p201 = scmp.lt.s32.totalorder %s198, 15
          %s202 = scalar_select %p201, %s198, 15
          %s203 = smul.addr %s202, 2
          %s204 = smul.addr %s200, 32
          %s205 = sadd.s32 %s203, %s204
          %s206 = smul.addr %s205, 8
          %s207 = scalar_lea.vmem %s0, %s206
          %s208 = smul.u32 8, %s22
        $region36: #{tpu_custom_call.1} parent=31 // pred_fallthru
          _
      $region32: #{tpu_custom_call.1} parent=5 // pred_fallthru
        _
      %p209 = scmp.le.s32.totalorder 1, %s14
      %p210 = scmp.lt.s32.totalorder %s14, 5
      %p211 = pnand %p209, %p210
      %p212 = pneg %p211
      // Predicated region
      $region37: #{tpu_custom_call.1} parent=5 // pred_check
        _
      $region38: #{tpu_custom_call.1} parent=5 // pred_check_branch
        %214 = sbr.rel (%p211) target = $region40
      $region39: #{tpu_custom_call.1} parent=5 // pred_region
        %s215 = ssub.s32 %s14, 1
        %s216 = smul.u32 8, %s24
        %p217 = scmp.lt.s32.totalorder %s23, 1
        %s218 = scalar_select %p217, %s23, 1
        %p219 = scmp.lt.s32.totalorder %s216, 15
        %s220 = scalar_select %p219, %s216, 15
        %s221 = smul.addr %s220, 2
        %s222 = smul.addr %s218, 32
        %s223 = sadd.s32 %s221, %s222
        %s224 = smul.addr %s223, 8
        %s225 = scalar_lea.vmem %s0, %s224
        %p226 = pneg %p54
        %p227 = pneg %p51
        %p228 = pneg %p75
        %p229 = pneg %p72
        %p230 = pneg %p96
        %p231 = pneg %p93
        %p232 = pneg %p117
        %p233 = pneg %p114
        %p234 = pneg %p138
        %p235 = pneg %p135
        %p236 = pneg %p164
        %p237 = pneg %p161
        %s238 = sand.u32 %s151, 1
        %s239 = scalar_lea.sflag [#allocation7], %s238
        %s240 = sand.u32 %s151, 1
        %s241 = scalar_lea.vmem [#allocation6], %s240
        %s242 = smul.u32 8, %s24
        %p243 = scmp.lt.s32.totalorder %s23, 1
        %s244 = scalar_select %p243, %s23, 1
        %p245 = scmp.lt.s32.totalorder %s242, 15
        %s246 = scalar_select %p245, %s242, 15
        %s247 = smul.addr %s246, 2
        %s248 = smul.addr %s244, 32
        %s249 = sadd.s32 %s247, %s248
        %s250 = smul.addr %s249, 8
        %s251 = scalar_lea.vmem %s0, %s250
        %s252 = smul.u32 8, %s24
        %p254 = scmp.eq.s32.totalorder %s24, 0
        // Predicated region
        $region41: #{tpu_custom_call.1} parent=39 // pred_check
          %p255 = pneg %p254
        $region42: #{tpu_custom_call.1} parent=39 // pred_check_branch
          %257 = sbr.rel (%p255) target = $region44
        $region43: #{tpu_custom_call.1} parent=39 // pred_region
          %258 = vst [vmem:[#allocation4] sm:$0x1] -inf
          %259 = vst [vmem:[#allocation5] sm:$0x1] inf
        $region44: #{tpu_custom_call.1} parent=39 // pred_fallthru
          _
        %v260 = vld [vmem:[%s251] sm:$0xff]
        %v261 = vld [vmem:[%s251 + $0x8] sm:$0xff]
        %v262 = vld [vmem:[%s251 + $0x10] sm:$0xff]
        %v263 = vld [vmem:[%s251 + $0x18] sm:$0xff]
        %v264 = vld [vmem:[%s251 + $0x20] sm:$0xff]
        %v265 = vld [vmem:[%s251 + $0x28] sm:$0xff]
        %v266 = vld [vmem:[%s251 + $0x30] sm:$0xff]
        %v267 = vld [vmem:[%s251 + $0x38] sm:$0xff]
        %v268 = vld [vmem:[%s251 + $0x40] sm:$0xff]
        %v269 = vld [vmem:[%s251 + $0x48] sm:$0xff]
        %v270 = vld [vmem:[%s251 + $0x50] sm:$0xff]
        %v271 = vld [vmem:[%s251 + $0x58] sm:$0xff]
        %v272 = vld [vmem:[%s251 + $0x60] sm:$0xff]
        %v273 = vld [vmem:[%s251 + $0x68] sm:$0xff]
        %v274 = vld [vmem:[%s251 + $0x70] sm:$0xff]
        %v275 = vld [vmem:[%s251 + $0x78] sm:$0xff]
        %v276 = vld [vmem:[%s1] sm:$0x7]
        %278 = vset.pattern.permute.xlu0 0
        %279 = vperm.xlu0 %278, %v260
        %v280 = vpop.permute.xlu0 %279
        %283 = vset.pattern.permute.xlu0 0
        %284 = vperm.xlu0 %283, %v261
        %v285 = vpop.permute.xlu0 %284
        %288 = vset.pattern.permute.xlu0 0
        %289 = vperm.xlu0 %288, %v262
        %v290 = vpop.permute.xlu0 %289
        %293 = vset.pattern.permute.xlu0 0
        %294 = vperm.xlu0 %293, %v263
        %v295 = vpop.permute.xlu0 %294
        %298 = vset.pattern.permute.xlu0 0
        %299 = vperm.xlu0 %298, %v264
        %v300 = vpop.permute.xlu0 %299
        %303 = vset.pattern.permute.xlu0 0
        %304 = vperm.xlu0 %303, %v265
        %v305 = vpop.permute.xlu0 %304
        %308 = vset.pattern.permute.xlu0 0
        %309 = vperm.xlu0 %308, %v266
        %v310 = vpop.permute.xlu0 %309
        %313 = vset.pattern.permute.xlu0 0
        %314 = vperm.xlu0 %313, %v267
        %v315 = vpop.permute.xlu0 %314
        %318 = vset.pattern.permute.xlu0 0
        %319 = vperm.xlu0 %318, %v268
        %v320 = vpop.permute.xlu0 %319
        %323 = vset.pattern.permute.xlu0 0
        %324 = vperm.xlu0 %323, %v269
        %v325 = vpop.permute.xlu0 %324
        %328 = vset.pattern.permute.xlu0 0
        %329 = vperm.xlu0 %328, %v270
        %v330 = vpop.permute.xlu0 %329
        %333 = vset.pattern.permute.xlu0 0
        %334 = vperm.xlu0 %333, %v271
        %v335 = vpop.permute.xlu0 %334
        %338 = vset.pattern.permute.xlu0 0
        %339 = vperm.xlu0 %338, %v272
        %v340 = vpop.permute.xlu0 %339
        %343 = vset.pattern.permute.xlu0 0
        %344 = vperm.xlu0 %343, %v273
        %v345 = vpop.permute.xlu0 %344
        %348 = vset.pattern.permute.xlu0 0
        %349 = vperm.xlu0 %348, %v274
        %v350 = vpop.permute.xlu0 %349
        %353 = vset.pattern.permute.xlu0 0
        %354 = vperm.xlu0 %353, %v275
        %v355 = vpop.permute.xlu0 %354
        %v357 = vlaneseq
        %v358 = vshrl.u32 %v357, 7
        %v359 = vsub.s32 0, %v358
        %v360 = vrot.slane %v276, %v359
        %v361 = vmul.f32 %v280, %v360
        %v362 = vmul.f32 %v285, %v360
        %v363 = vmul.f32 %v290, %v360
        %v364 = vmul.f32 %v295, %v360
        %v365 = vmul.f32 %v300, %v360
        %v366 = vmul.f32 %v305, %v360
        %v367 = vmul.f32 %v310, %v360
        %v368 = vmul.f32 %v315, %v360
        %v369 = vmul.f32 %v320, %v360
        %v370 = vmul.f32 %v325, %v360
        %v371 = vmul.f32 %v330, %v360
        %v372 = vmul.f32 %v335, %v360
        %v373 = vmul.f32 %v340, %v360
        %v374 = vmul.f32 %v345, %v360
        %v375 = vmul.f32 %v350, %v360
        %v376 = vmul.f32 %v355, %v360
        %377 = vset.pattern.permute.xlu0 1
        %378 = vperm.xlu0 %377, %v260
        %v379 = vpop.permute.xlu0 %378
        %381 = vset.pattern.permute.xlu0 1
        %382 = vperm.xlu0 %381, %v261
        %v383 = vpop.permute.xlu0 %382
        %385 = vset.pattern.permute.xlu0 1
        %386 = vperm.xlu0 %385, %v262
        %v387 = vpop.permute.xlu0 %386
        %389 = vset.pattern.permute.xlu0 1
        %390 = vperm.xlu0 %389, %v263
        %v391 = vpop.permute.xlu0 %390
        %393 = vset.pattern.permute.xlu0 1
        %394 = vperm.xlu0 %393, %v264
        %v395 = vpop.permute.xlu0 %394
        %397 = vset.pattern.permute.xlu0 1
        %398 = vperm.xlu0 %397, %v265
        %v399 = vpop.permute.xlu0 %398
        %401 = vset.pattern.permute.xlu0 1
        %402 = vperm.xlu0 %401, %v266
        %v403 = vpop.permute.xlu0 %402
        %405 = vset.pattern.permute.xlu0 1
        %406 = vperm.xlu0 %405, %v267
        %v407 = vpop.permute.xlu0 %406
        %409 = vset.pattern.permute.xlu0 1
        %410 = vperm.xlu0 %409, %v268
        %v411 = vpop.permute.xlu0 %410
        %413 = vset.pattern.permute.xlu0 1
        %414 = vperm.xlu0 %413, %v269
        %v415 = vpop.permute.xlu0 %414
        %417 = vset.pattern.permute.xlu0 1
        %418 = vperm.xlu0 %417, %v270
        %v419 = vpop.permute.xlu0 %418
        %421 = vset.pattern.permute.xlu0 1
        %422 = vperm.xlu0 %421, %v271
        %v423 = vpop.permute.xlu0 %422
        %425 = vset.pattern.permute.xlu0 1
        %426 = vperm.xlu0 %425, %v272
        %v427 = vpop.permute.xlu0 %426
        %429 = vset.pattern.permute.xlu0 1
        %430 = vperm.xlu0 %429, %v273
        %v431 = vpop.permute.xlu0 %430
        %433 = vset.pattern.permute.xlu0 1
        %434 = vperm.xlu0 %433, %v274
        %v435 = vpop.permute.xlu0 %434
        %437 = vset.pattern.permute.xlu0 1
        %438 = vperm.xlu0 %437, %v275
        %v439 = vpop.permute.xlu0 %438
        %v441 = vlaneseq
        %v442 = vshrl.u32 %v441, 7
        %v443 = vsub.s32 1, %v442
        %v444 = vrot.slane %v276, %v443
        %v445 = vmul.f32 %v379, %v444
        %v446 = vmul.f32 %v383, %v444
        %v447 = vmul.f32 %v387, %v444
        %v448 = vmul.f32 %v391, %v444
        %v449 = vmul.f32 %v395, %v444
        %v450 = vmul.f32 %v399, %v444
        %v451 = vmul.f32 %v403, %v444
        %v452 = vmul.f32 %v407, %v444
        %v453 = vmul.f32 %v411, %v444
        %v454 = vmul.f32 %v415, %v444
        %v455 = vmul.f32 %v419, %v444
        %v456 = vmul.f32 %v423, %v444
        %v457 = vmul.f32 %v427, %v444
        %v458 = vmul.f32 %v431, %v444
        %v459 = vmul.f32 %v435, %v444
        %v460 = vmul.f32 %v439, %v444
        %v461 = vadd.f32 %v361, %v445
        %v462 = vadd.f32 %v362, %v446
        %v463 = vadd.f32 %v363, %v447
        %v464 = vadd.f32 %v364, %v448
        %v465 = vadd.f32 %v365, %v449
        %v466 = vadd.f32 %v366, %v450
        %v467 = vadd.f32 %v367, %v451
        %v468 = vadd.f32 %v368, %v452
        %v469 = vadd.f32 %v369, %v453
        %v470 = vadd.f32 %v370, %v454
        %v471 = vadd.f32 %v371, %v455
        %v472 = vadd.f32 %v372, %v456
        %v473 = vadd.f32 %v373, %v457
        %v474 = vadd.f32 %v374, %v458
        %v475 = vadd.f32 %v375, %v459
        %v476 = vadd.f32 %v376, %v460
        %477 = vset.pattern.permute.xlu0 2
        %478 = vperm.xlu0 %477, %v260
        %v479 = vpop.permute.xlu0 %478
        %481 = vset.pattern.permute.xlu0 2
        %482 = vperm.xlu0 %481, %v261
        %v483 = vpop.permute.xlu0 %482
        %485 = vset.pattern.permute.xlu0 2
        %486 = vperm.xlu0 %485, %v262
        %v487 = vpop.permute.xlu0 %486
        %489 = vset.pattern.permute.xlu0 2
        %490 = vperm.xlu0 %489, %v263
        %v491 = vpop.permute.xlu0 %490
        %493 = vset.pattern.permute.xlu0 2
        %494 = vperm.xlu0 %493, %v264
        %v495 = vpop.permute.xlu0 %494
        %497 = vset.pattern.permute.xlu0 2
        %498 = vperm.xlu0 %497, %v265
        %v499 = vpop.permute.xlu0 %498
        %501 = vset.pattern.permute.xlu0 2
        %502 = vperm.xlu0 %501, %v266
        %v503 = vpop.permute.xlu0 %502
        %505 = vset.pattern.permute.xlu0 2
        %506 = vperm.xlu0 %505, %v267
        %v507 = vpop.permute.xlu0 %506
        %509 = vset.pattern.permute.xlu0 2
        %510 = vperm.xlu0 %509, %v268
        %v511 = vpop.permute.xlu0 %510
        %513 = vset.pattern.permute.xlu0 2
        %514 = vperm.xlu0 %513, %v269
        %v515 = vpop.permute.xlu0 %514
        %517 = vset.pattern.permute.xlu0 2
        %518 = vperm.xlu0 %517, %v270
        %v519 = vpop.permute.xlu0 %518
        %521 = vset.pattern.permute.xlu0 2
        %522 = vperm.xlu0 %521, %v271
        %v523 = vpop.permute.xlu0 %522
        %525 = vset.pattern.permute.xlu0 2
        %526 = vperm.xlu0 %525, %v272
        %v527 = vpop.permute.xlu0 %526
        %529 = vset.pattern.permute.xlu0 2
        %530 = vperm.xlu0 %529, %v273
        %v531 = vpop.permute.xlu0 %530
        %533 = vset.pattern.permute.xlu0 2
        %534 = vperm.xlu0 %533, %v274
        %v535 = vpop.permute.xlu0 %534
        %537 = vset.pattern.permute.xlu0 2
        %538 = vperm.xlu0 %537, %v275
        %v539 = vpop.permute.xlu0 %538
        %v541 = vlaneseq
        %v542 = vshrl.u32 %v541, 7
        %v543 = vsub.s32 2, %v542
        %v544 = vrot.slane %v276, %v543
        %v545 = vmul.f32 %v479, %v544
        %v546 = vmul.f32 %v483, %v544
        %v547 = vmul.f32 %v487, %v544
        %v548 = vmul.f32 %v491, %v544
        %v549 = vmul.f32 %v495, %v544
        %v550 = vmul.f32 %v499, %v544
        %v551 = vmul.f32 %v503, %v544
        %v552 = vmul.f32 %v507, %v544
        %v553 = vmul.f32 %v511, %v544
        %v554 = vmul.f32 %v515, %v544
        %v555 = vmul.f32 %v519, %v544
        %v556 = vmul.f32 %v523, %v544
        %v557 = vmul.f32 %v527, %v544
        %v558 = vmul.f32 %v531, %v544
        %v559 = vmul.f32 %v535, %v544
        %v560 = vmul.f32 %v539, %v544
        %v561 = vadd.f32 %v461, %v545
        %v562 = vadd.f32 %v462, %v546
        %v563 = vadd.f32 %v463, %v547
        %v564 = vadd.f32 %v464, %v548
        %v565 = vadd.f32 %v465, %v549
        %v566 = vadd.f32 %v466, %v550
        %v567 = vadd.f32 %v467, %v551
        %v568 = vadd.f32 %v468, %v552
        %v569 = vadd.f32 %v469, %v553
        %v570 = vadd.f32 %v470, %v554
        %v571 = vadd.f32 %v471, %v555
        %v572 = vadd.f32 %v472, %v556
        %v573 = vadd.f32 %v473, %v557
        %v574 = vadd.f32 %v474, %v558
        %v575 = vadd.f32 %v475, %v559
        %v576 = vadd.f32 %v476, %v560
        %v577 = vld [vmem:[%s2] sm:$0x1]
        %v579 = vlaneseq
        %v580 = vshrl.u32 %v579, 7
        %v581 = vsub.s32 0, %v580
        %v582 = vrot.slane %v577, %v581
        %v584 = vadd.f32 %v561, %v582
        %v585 = vadd.f32 %v562, %v582
        %v586 = vadd.f32 %v563, %v582
        %v587 = vadd.f32 %v564, %v582
        %v588 = vadd.f32 %v565, %v582
        %v589 = vadd.f32 %v566, %v582
        %v590 = vadd.f32 %v567, %v582
        %v591 = vadd.f32 %v568, %v582
        %v592 = vadd.f32 %v569, %v582
        %v593 = vadd.f32 %v570, %v582
        %v594 = vadd.f32 %v571, %v582
        %v595 = vadd.f32 %v572, %v582
        %v596 = vadd.f32 %v573, %v582
        %v597 = vadd.f32 %v574, %v582
        %v598 = vadd.f32 %v575, %v582
        %v599 = vadd.f32 %v576, %v582
        %v600 = vmax.f32 %v584, 0.0
        %v601 = vmax.f32 %v585, 0.0
        %v602 = vmax.f32 %v586, 0.0
        %v603 = vmax.f32 %v587, 0.0
        %v604 = vmax.f32 %v588, 0.0
        %v605 = vmax.f32 %v589, 0.0
        %v606 = vmax.f32 %v590, 0.0
        %v607 = vmax.f32 %v591, 0.0
        %v608 = vmax.f32 %v592, 0.0
        %v609 = vmax.f32 %v593, 0.0
        %v610 = vmax.f32 %v594, 0.0
        %v611 = vmax.f32 %v595, 0.0
        %v612 = vmax.f32 %v596, 0.0
        %v613 = vmax.f32 %v597, 0.0
        %v614 = vmax.f32 %v598, 0.0
        %v615 = vmax.f32 %v599, 0.0
        %616 = vst [vmem:[#allocation2] sm:$0xff] %v600
        %617 = vst [vmem:[#allocation2 + $0x8] sm:$0xff] %v601
        %618 = vst [vmem:[#allocation2 + $0x10] sm:$0xff] %v602
        %619 = vst [vmem:[#allocation2 + $0x18] sm:$0xff] %v603
        %620 = vst [vmem:[#allocation2 + $0x20] sm:$0xff] %v604
        %621 = vst [vmem:[#allocation2 + $0x28] sm:$0xff] %v605
        %622 = vst [vmem:[#allocation2 + $0x30] sm:$0xff] %v606
        %623 = vst [vmem:[#allocation2 + $0x38] sm:$0xff] %v607
        %624 = vst [vmem:[#allocation2 + $0x40] sm:$0xff] %v608
        %625 = vst [vmem:[#allocation2 + $0x48] sm:$0xff] %v609
        %626 = vst [vmem:[#allocation2 + $0x50] sm:$0xff] %v610
        %627 = vst [vmem:[#allocation2 + $0x58] sm:$0xff] %v611
        %628 = vst [vmem:[#allocation2 + $0x60] sm:$0xff] %v612
        %629 = vst [vmem:[#allocation2 + $0x68] sm:$0xff] %v613
        %630 = vst [vmem:[#allocation2 + $0x70] sm:$0xff] %v614
        %631 = vst [vmem:[#allocation2 + $0x78] sm:$0xff] %v615
        %v632 = vld [vmem:[#allocation2] ss:$2 sm:$0xff]
        %s633 = scalar_lea.vmem [#allocation2], 16
        %v634 = vld [vmem:[%s633] ss:$2 sm:$0xff]
        %s635 = scalar_lea.vmem [#allocation2], 32
        %v636 = vld [vmem:[%s635] ss:$2 sm:$0xff]
        %s637 = scalar_lea.vmem [#allocation2], 48
        %v638 = vld [vmem:[%s637] ss:$2 sm:$0xff]
        %s639 = scalar_lea.vmem [#allocation2], 64
        %v640 = vld [vmem:[%s639] ss:$2 sm:$0xff]
        %s641 = scalar_lea.vmem [#allocation2], 80
        %v642 = vld [vmem:[%s641] ss:$2 sm:$0xff]
        %s643 = scalar_lea.vmem [#allocation2], 96
        %v644 = vld [vmem:[%s643] ss:$2 sm:$0xff]
        %s645 = scalar_lea.vmem [#allocation2], 112
        %v646 = vld [vmem:[%s645] ss:$2 sm:$0xff]
        %s647 = scalar_lea.vmem [#allocation2], 1
        %v648 = vld [vmem:[%s647] ss:$2 sm:$0xff]
        %s649 = scalar_lea.vmem [#allocation2], 17
        %v650 = vld [vmem:[%s649] ss:$2 sm:$0xff]
        %s651 = scalar_lea.vmem [#allocation2], 33
        %v652 = vld [vmem:[%s651] ss:$2 sm:$0xff]
        %s653 = scalar_lea.vmem [#allocation2], 49
        %v654 = vld [vmem:[%s653] ss:$2 sm:$0xff]
        %s655 = scalar_lea.vmem [#allocation2], 65
        %v656 = vld [vmem:[%s655] ss:$2 sm:$0xff]
        %s657 = scalar_lea.vmem [#allocation2], 81
        %v658 = vld [vmem:[%s657] ss:$2 sm:$0xff]
        %s659 = scalar_lea.vmem [#allocation2], 97
        %v660 = vld [vmem:[%s659] ss:$2 sm:$0xff]
        %s661 = scalar_lea.vmem [#allocation2], 113
        %v662 = vld [vmem:[%s661] ss:$2 sm:$0xff]
        %v663 = vmax.f32 %v632, %v648
        %v664 = vmax.f32 %v634, %v650
        %v665 = vmax.f32 %v636, %v652
        %v666 = vmax.f32 %v638, %v654
        %v667 = vmax.f32 %v640, %v656
        %v668 = vmax.f32 %v642, %v658
        %v669 = vmax.f32 %v644, %v660
        %v670 = vmax.f32 %v646, %v662
        %671 = vst [vmem:[#allocation3] sm:$0xff] %v663
        %672 = vst [vmem:[#allocation3 + $0x8] sm:$0xff] %v664
        %673 = vst [vmem:[#allocation3 + $0x10] sm:$0xff] %v665
        %674 = vst [vmem:[#allocation3 + $0x18] sm:$0xff] %v666
        %675 = vst [vmem:[#allocation3 + $0x20] sm:$0xff] %v667
        %676 = vst [vmem:[#allocation3 + $0x28] sm:$0xff] %v668
        %677 = vst [vmem:[#allocation3 + $0x30] sm:$0xff] %v669
        %678 = vst [vmem:[#allocation3 + $0x38] sm:$0xff] %v670
        %v679 = vld [vmem:[#allocation3] sm:$0xff]
        %v680 = vld [vmem:[#allocation3 + $0x10] sm:$0xff]
        %v681 = vld [vmem:[#allocation3 + $0x20] sm:$0xff]
        %v682 = vld [vmem:[#allocation3 + $0x30] sm:$0xff]
        %s683 = scalar_lea.vmem [#allocation3], 8
        %v684 = vld [vmem:[%s683] sm:$0xff]
        %v685 = vld [vmem:[%s683 + $0x10] sm:$0xff]
        %v686 = vld [vmem:[%s683 + $0x20] sm:$0xff]
        %v687 = vld [vmem:[%s683 + $0x30] sm:$0xff]
        %v688 = vmax.f32 %v679, %v684
        %v689 = vmax.f32 %v680, %v685
        %v690 = vmax.f32 %v681, %v686
        %v691 = vmax.f32 %v682, %v687
        %v692 = vpack.c.bf16 %v689, %v688
        %v693 = vpack.c.bf16 %v691, %v690
        %v694 = vld [vmem:[%s3] sm:$0xf]
        %v695 = vld [vmem:[%s3 + $0x4] sm:$0xf]
        %v696 = vld [vmem:[%s3 + $0x8] sm:$0xf]
        %v697 = vld [vmem:[%s3 + $0xc] sm:$0xf]
        %v698 = vld [vmem:[%s3 + $0x10] sm:$0xf]
        %v699 = vld [vmem:[%s3 + $0x14] sm:$0xf]
        %v700 = vld [vmem:[%s3 + $0x18] sm:$0xf]
        %v701 = vld [vmem:[%s3 + $0x1c] sm:$0xf]
        %v702 = vld [vmem:[%s3 + $0x20] sm:$0xf]
        %v703 = vld [vmem:[%s3 + $0x24] sm:$0xf]
        %v704 = vld [vmem:[%s3 + $0x28] sm:$0xf]
        %v705 = vld [vmem:[%s3 + $0x2c] sm:$0xf]
        %v706 = vld [vmem:[%s3 + $0x30] sm:$0xf]
        %v707 = vld [vmem:[%s3 + $0x34] sm:$0xf]
        %v708 = vld [vmem:[%s3 + $0x38] sm:$0xf]
        %v709 = vld [vmem:[%s3 + $0x3c] sm:$0xf]
        %v710 = vld [vmem:[%s4] sm:$0x1]
        %v712 = vlaneseq
        %v713 = vshrl.u32 %v712, 7
        %v714 = vsub.s32 0, %v713
        %v715 = vrot.slane %v710, %v714
        %v733 = vunpack.c.l.b16 %v694
        %v734 = vunpack.c.l.b16 %v695
        %v735 = vunpack.c.l.b16 %v696
        %v736 = vunpack.c.l.b16 %v697
        %v737 = vunpack.c.l.b16 %v698
        %v738 = vunpack.c.l.b16 %v699
        %v739 = vunpack.c.l.b16 %v700
        %v740 = vunpack.c.l.b16 %v701
        %v741 = vunpack.c.l.b16 %v702
        %v742 = vunpack.c.l.b16 %v703
        %v743 = vunpack.c.l.b16 %v704
        %v744 = vunpack.c.l.b16 %v705
        %v745 = vunpack.c.l.b16 %v706
        %v746 = vunpack.c.l.b16 %v707
        %v747 = vunpack.c.l.b16 %v708
        %v748 = vunpack.c.l.b16 %v709
        %v749 = vpack.c.b16 %v734, %v733
        %v750 = vpack.c.b16 %v736, %v735
        %v751 = vpack.c.b16 %v738, %v737
        %v752 = vpack.c.b16 %v740, %v739
        %v753 = vpack.c.b16 %v742, %v741
        %v754 = vpack.c.b16 %v744, %v743
        %v755 = vpack.c.b16 %v746, %v745
        %v756 = vpack.c.b16 %v748, %v747
        %765 = vmatprep.subr.bf16.mxu0 0
        %766 = vmatpush1.bf16.msra.mxu0 %v749
        %767 = vmatprep.subr.bf16.mxu0 0
        %768 = vmatpush1.bf16.msra.mxu0 %v750
        %769 = vmatprep.subr.bf16.mxu0 0
        %770 = vmatpush1.bf16.msra.mxu0 %v751
        %771 = vmatprep.subr.bf16.mxu0 0
        %772 = vmatpush1.bf16.msra.mxu0 %v752
        %773 = vmatprep.subr.bf16.mxu0 0
        %774 = vmatpush1.bf16.msra.mxu0 %v753
        %775 = vmatprep.subr.bf16.mxu0 0
        %776 = vmatpush1.bf16.msra.mxu0 %v754
        %777 = vmatprep.subr.bf16.mxu0 0
        %778 = vmatpush1.bf16.msra.mxu0 %v755
        %779 = vmatprep.subr.bf16.mxu0 0
        %780 = vmatpush1.bf16.msra.mxu0 %v756
        %781 = vmatprep.subr.bf16.mxu0 0
        %782 = vmatpush1.bf16.msra.mxu0 0
        %783 = vmatprep.subr.bf16.mxu0 0
        %784 = vmatpush1.bf16.msra.mxu0 0
        %785 = vmatprep.subr.bf16.mxu0 0
        %786 = vmatpush1.bf16.msra.mxu0 0
        %787 = vmatprep.subr.bf16.mxu0 0
        %788 = vmatpush1.bf16.msra.mxu0 0
        %789 = vmatprep.subr.bf16.mxu0 0
        %790 = vmatpush1.bf16.msra.mxu0 0
        %791 = vmatprep.subr.bf16.mxu0 0
        %792 = vmatpush1.bf16.msra.mxu0 0
        %793 = vmatprep.subr.bf16.mxu0 0
        %794 = vmatpush1.bf16.msra.mxu0 0
        %795 = vmatprep.subr.bf16.mxu0 0
        %796 = vmatpush1.bf16.msra.mxu0 0
        %797 = vmatprep.mubr.bf16.mxu0 0
        %798 = vmatmul.mubr.bf16.gmra.mrb[0].mxu0 %v692
        %v799 = vpop.f32.mrb[0].mxu0
        %v800 = vadd.f32 %v715, %v799
        %v801 = vpop.f32.mrb[0].mxu0
        %v802 = vpop.f32.mrb[0].mxu0
        %v803 = vadd.f32 %v715, %v802
        %v804 = vpop.f32.mrb[0].mxu0
        %805 = vmatprep.mubr.bf16.mxu0 0
        %806 = vmatmul.mubr.bf16.gmra.mrb[0].mxu0 %v693
        %v807 = vpop.f32.mrb[0].mxu0
        %v808 = vadd.f32 %v715, %v807
        %v809 = vpop.f32.mrb[0].mxu0
        %v810 = vpop.f32.mrb[0].mxu0
        %v811 = vadd.f32 %v715, %v810
        %v812 = vpop.f32.mrb[0].mxu0
        %813 = vdwg.mxu0
        %v814 = vld [vmem:[#allocation4] sm:$0x1]
        %v815 = vmax.f32 %v800, %v803
        %v816 = vmax.f32 %v808, %v811
        %v817 = vmax.f32 %v815, %v816
        %v818 = vrot.slane %v817, 4
        %v819 = vmax.f32 %v817, %v818
        %v820 = vrot.slane %v819, 2
        %v821 = vmax.f32 %v819, %v820
        %v822 = vrot.slane %v821, 1
        %v823 = vmax.f32 %v821, %v822
        %v824 = vmax.f32 %v814, %v823
        %825 = vst [vmem:[#allocation4] sm:$0x1] %v824
        %v826 = vld [vmem:[#allocation5] sm:$0x1]
        %v827 = vmin.f32 %v800, %v803
        %v828 = vmin.f32 %v808, %v811
        %v829 = vmin.f32 %v827, %v828
        %v830 = vrot.slane %v829, 4
        %v831 = vmin.f32 %v829, %v830
        %v832 = vrot.slane %v831, 2
        %v833 = vmin.f32 %v831, %v832
        %v834 = vrot.slane %v833, 1
        %v835 = vmin.f32 %v833, %v834
        %v836 = vmin.f32 %v826, %v835
        %837 = vst [vmem:[#allocation5] sm:$0x1] %v836
        %p838 = scmp.eq.s32.totalorder %s24, 1
        // Predicated region
        $region45: #{tpu_custom_call.1} parent=39 // pred_check
          %p839 = pneg %p838
        $region46: #{tpu_custom_call.1} parent=39 // pred_check_branch
          %841 = sbr.rel (%p839) target = $region48
        $region47: #{tpu_custom_call.1} parent=39 // pred_region
          %v842 = vld [vmem:[#allocation4] sm:$0x1]
          %v843 = vld [vmem:[#allocation5] sm:$0x1]
          %v844 = vadd.f32 %v842, %v843
          %v845 = vmul.f32 %v844, 0.5
          %846 = vst [vmem:[%s241] sm:$0x1] %v845
        $region48: #{tpu_custom_call.1} parent=39 // pred_fallthru
          _
        %s847 = sand.u32 %s151, 1
        %s848 = scalar_lea.sflag [#allocation7], %s847
        %s849 = sand.u32 %s151, 1
        %s850 = scalar_lea.vmem [#allocation6], %s849
        // Predicated region
        $region49: #{tpu_custom_call.1} parent=39 // pred_check
          %p851 = pneg %p161
        $region50: #{tpu_custom_call.1} parent=39 // pred_check_branch
          %853 = sbr.rel (%p851) target = $region52
        $region51: #{tpu_custom_call.1} parent=39 // pred_region
          %s855 = ssub.s32 16, 16
          %856 = vsyncadd %s848, %s855
          %s857 = smul.addr %s23, 16
          %s858 = scalar_lea.hbm %s5, %s857
          %s860 = sshll.u32 %s850, 4
          %s861 = int_to_ptr.vmem [resolvable:$true] %s860
          %863 = dma.vmem_to_hbm [thread:$0]  %s861, 16, %s858, %s848
        $region52: #{tpu_custom_call.1} parent=39 // pred_fallthru
          _
      $region40: #{tpu_custom_call.1} parent=5 // pred_fallthru
        _
      %p864 = scmp.le.s32.totalorder 2, %s14
      // Predicated region
      $region53: #{tpu_custom_call.1} parent=5 // pred_check
        %p865 = pneg %p864
      $region54: #{tpu_custom_call.1} parent=5 // pred_check_branch
        %867 = sbr.rel (%p865) target = $region56
      $region55: #{tpu_custom_call.1} parent=5 // pred_region
        %s868 = ssub.s32 %s14, 2
        // Predicated region
        $region57: #{tpu_custom_call.1} parent=55 // pred_check
          %p869 = pneg %p167
        $region58: #{tpu_custom_call.1} parent=55 // pred_check_branch
          %871 = sbr.rel (%p869) target = $region60
        $region59: #{tpu_custom_call.1} parent=55 // pred_region
          %s872 = sand.u32 %s152, 1
          %s873 = scalar_lea.sflag [#allocation7], %s872
          %s874 = sand.u32 %s152, 1
          %s875 = scalar_lea.vmem [#allocation6], %s874
          %876 = dma.done %s873, 16
        $region60: #{tpu_custom_call.1} parent=55 // pred_fallthru
          _
      $region56: #{tpu_custom_call.1} parent=5 // pred_fallthru
        _
    $region6: #{tpu_custom_call.1} parent=1 // loop_footer
      %s18 = sadd.s32 1, %s14
    $region7: #{tpu_custom_call.1} parent=1 // loop_footer_branch
      %13 = sbr.rel target = $region3
    $region8: #{tpu_custom_call.1} parent=1 // loop_exit
      _
    %877 = vsyncpa [#allocation7], 1
    %s878 = scalar_lea.sflag [#allocation7], 1
    %879 = vsyncpa %s878, 1

</llo_original>
